<compile_context>
chip_gen: v7x
topology: tpu7x:2x2x1
jax: 0.10.0
libtpu: 0.0.40
codegen_flags: <defaults>
</compile_context>

<pallas_src>
import functools
import math

import jax
import jax.numpy as jnp
from jax import lax
from jax.experimental import pallas as pl
from jax.experimental.pallas import tpu as pltpu


def _round_up(x, m):
    return ((x + m - 1) // m) * m


def _cdiv(a, b):
    return -(-a // b)


def _vmem_capacity_bytes():
    """Physical VMEM per core; conservative (v7x) default if the query fails."""
    try:
        return int(pltpu.get_tpu_info().vmem_capacity_bytes)
    except Exception:
        return 64 << 20


def _gsl_kernel_full_k(x_ref, w_ref, b_ref, o_ref):
    """1-D grid over M tiles; K fits in a single resident tile.

    x_ref: (B, Kp)   resident activations
    w_ref: (tn, Kp)  weight tile, torch (out, in) layout
    b_ref: (1, tn)   bias tile
    o_ref: (B, tn)   output tile
    """
    y = lax.dot_general(
        x_ref[...], w_ref[...],
        dimension_numbers=(((1,), (1,)), ((), ())),
        preferred_element_type=jnp.float32,
    ) + b_ref[...].astype(jnp.float32)
    o_ref[...] = jax.nn.sigmoid(y).astype(o_ref.dtype)


def _gsl_kernel_kt(x_ref, w_ref, b_ref, o_ref, acc_ref, *, tk):
    """2-D grid (M tiles "parallel", K tiles "arbitrary", K innermost).

    x_ref:   (B, Kp)   resident activations (constant block -> fetched once)
    w_ref:   (tn, tk)  weight tile, torch (out, in) layout
    b_ref:   (1, tn)   bias tile
    o_ref:   (B, tn)   output tile (same block for every k)
    acc_ref: (B, tn)   f32 accumulator scratch
    """
    k = pl.program_id(1)

    @pl.when(k == 0)
    def _():
        acc_ref[...] = jnp.zeros_like(acc_ref)

    x_blk = x_ref[:, pl.ds(pl.multiple_of(k * tk, 128), tk)]
    acc_ref[...] += lax.dot_general(
        x_blk, w_ref[...],
        dimension_numbers=(((1,), (1,)), ((), ())),
        preferred_element_type=jnp.float32,
    )

    @pl.when(k == pl.num_programs(1) - 1)
    def _():
        y = acc_ref[...] + b_ref[...].astype(jnp.float32)
        o_ref[...] = jax.nn.sigmoid(y).astype(o_ref.dtype)


def graph_structure_learning(x, weight, bias, *, tn=None, tk=None,
                             stream_dtype=jnp.bfloat16, use_pallas=None):
    """Forward pass of GraphStructureLearning.

    x:      (B, N, C)
    weight: (N*N, N*C)  -- PyTorch nn.Linear layout (out_features, in_features)
    bias:   (N*N,)
    returns sigmoid(x.reshape(B, N*C) @ weight.T + bias).reshape(B, N, N)

    stream_dtype: dtype the weight / activations are streamed in (default bf16;
                  accumulation is always f32).  Pass None to stream as-is.
    """
    B, N, C = x.shape
    K = N * C
    M = N * N
    out_dtype = x.dtype

    x_flat = x.reshape(B, K)  # matches torch .view(B, -1) on contiguous (B, N, C)

    Kr = _round_up(K, 128)
    Mr = _round_up(M, 128)

    # Small-problem fallback: Pallas launch + pad-to-128 overhead dominates for
    # tiny weights; XLA's fused matmul is faster there.
    if use_pallas is None:
        use_pallas = (Mr * Kr) >= (512 * 512)
    if not use_pallas:
        y = (x_flat.astype(jnp.float32) @ weight.T.astype(jnp.float32)
             + bias.astype(jnp.float32))
        return jax.nn.sigmoid(y).astype(out_dtype).reshape(B, N, N)

    # ---- generation-aware tile selection (multiples of 128, minimal padding) ----
    vmem_phys = _vmem_capacity_bytes()
    if tn is None:
        tn = 2048 if vmem_phys > (80 << 20) else 1024   # bigger M tile on v5e/v6e
    if tk is None:
        tk = 1024
    tn = max(128, _round_up(int(tn), 128))
    tk = max(128, _round_up(int(tk), 128))
    tn = min(tn, Mr)
    tk = min(tk, Kr)

    # Number of K tiles, then balance tile size to minimize zero-padding.
    n_k = _cdiv(Kr, tk)
    tk = _round_up(_cdiv(Kr, n_k), 128)
    Kp = n_k * tk

    # Number of M tiles; prefer >=2 so the "parallel" axis shards across both
    # v7x TensorCores -- but only when it adds no extra padding.
    n_m = _cdiv(Mr, tn)
    if n_m == 1 and Mr >= 256 and (Mr // 2) % 128 == 0:
        n_m = 2
    tn = _round_up(_cdiv(Mr, n_m), 128)
    Mp = n_m * tn

    # ---- prepare operands (pad with zeros; padded-K contributes 0, padded-M is
    #      sliced off after) and cast to the streaming dtype ----
    x_s = x_flat
    w_s = weight
    if Kp != K:
        x_s = jnp.pad(x_s, ((0, 0), (0, Kp - K)))
    if (Mp, Kp) != (M, K):
        w_s = jnp.pad(w_s, ((0, Mp - M), (0, Kp - K)))
    if stream_dtype is not None:
        x_s = x_s.astype(stream_dtype)
        w_s = w_s.astype(stream_dtype)
    b2 = bias if Mp == M else jnp.pad(bias, (0, Mp - M))
    b2 = b2.reshape(1, Mp)

    # ---- VMEM budget (double-buffered tiles + resident x + f32 accumulator) ----
    w_item = jnp.dtype(w_s.dtype).itemsize
    x_item = jnp.dtype(x_s.dtype).itemsize
    o_item = jnp.dtype(out_dtype).itemsize
    b_item = jnp.dtype(b2.dtype).itemsize
    tk_eff = Kp if n_k == 1 else tk
    vmem_est = (2 * tn * tk_eff * w_item
                + B * Kp * x_item
                + 2 * B * tn * o_item
                + 2 * tn * b_item
                + B * tn * 4)
    cap = (48 << 20) if vmem_phys <= (64 << 20) else (96 << 20)
    vmem_limit = int(min(max(2 * vmem_est, 32 << 20), cap))

    out_shape = jax.ShapeDtypeStruct((B, Mp), out_dtype)

    if n_k == 1:
        # Single K tile: 1-D grid over M only, no accumulator / revisit pattern.
        out_flat = pl.pallas_call(
            _gsl_kernel_full_k,
            out_shape=out_shape,
            grid=(n_m,),
            in_specs=[
                pl.BlockSpec((B, Kp), lambda j: (0, 0)),    # x: resident
                pl.BlockSpec((tn, Kp), lambda j: (j, 0)),   # weight (torch layout)
                pl.BlockSpec((1, tn), lambda j: (0, j)),    # bias tile
            ],
            out_specs=pl.BlockSpec((B, tn), lambda j: (0, j)),
            compiler_params=pltpu.CompilerParams(
                dimension_semantics=("parallel",),
                vmem_limit_bytes=vmem_limit,
            ),
        )(x_s, w_s, b2)
    else:
        out_flat = pl.pallas_call(
            functools.partial(_gsl_kernel_kt, tk=tk),
            out_shape=out_shape,
            grid=(n_m, n_k),
            in_specs=[
                pl.BlockSpec((B, Kp), lambda j, k: (0, 0)),   # x: resident (fetched once)
                pl.BlockSpec((tn, tk), lambda j, k: (j, k)),  # weight (torch layout)
                pl.BlockSpec((1, tn), lambda j, k: (0, j)),   # bias tile
            ],
            out_specs=pl.BlockSpec((B, tn), lambda j, k: (0, j)),
            scratch_shapes=[pltpu.VMEM((B, tn), jnp.float32)],
            compiler_params=pltpu.CompilerParams(
                dimension_semantics=("parallel", "arbitrary"),
                vmem_limit_bytes=vmem_limit,
            ),
        )(x_s, w_s, b2)

    if Mp != M:
        out_flat = out_flat[:, :M]
    return out_flat.reshape(B, N, N)


def init_params(key, num_nodes, in_channels, dtype=jnp.float32):
    """Deterministic xavier_uniform_ weight, zero bias (matches init_weights)."""
    fan_in = in_channels * num_nodes
    fan_out = num_nodes * num_nodes
    a = math.sqrt(6.0 / (fan_in + fan_out))
    weight = jax.random.uniform(
        key, (fan_out, fan_in), dtype=dtype, minval=-a, maxval=a
    )
    bias = jnp.zeros((fan_out,), dtype=dtype)
    return weight, bias


if __name__ == "__main__":
    key = jax.random.PRNGKey(0)
    kx1, kw1, kx2, kw2 = jax.random.split(key, 4)

    # Case 1: tiny module config, f32 streaming, single K tile -> 1-D grid kernel.
    B1, N1, C1 = 2, 8, 4
    x1 = jax.random.normal(kx1, (B1, N1, C1), dtype=jnp.float32)
    w1, b1 = init_params(kw1, N1, C1)
    out1 = graph_structure_learning(x1, w1, b1, stream_dtype=None, use_pallas=True)
    jax.block_until_ready(out1)
    ref1 = jax.nn.sigmoid(
        x1.reshape(B1, -1) @ w1.T + b1
    ).reshape(B1, N1, N1)
    assert out1.shape == (B1, N1, N1)
    assert jnp.allclose(out1, ref1, atol=1e-5), "f32 / 1-D path mismatch"

    # Case 2: larger config, default bf16 streaming, small tiles to force the
    #         K-tiled (2-D grid + f32 accumulator) path.
    B2, N2, C2 = 2, 16, 16
    x2 = jax.random.normal(kx2, (B2, N2, C2), dtype=jnp.float32)
    w2, b2 = init_params(kw2, N2, C2)
    out2 = graph_structure_learning(x2, w2, b2, tn=128, tk=128, use_pallas=True)
    jax.block_until_ready(out2)
    ref2 = jax.nn.sigmoid(
        x2.reshape(B2, -1) @ w2.T + b2
    ).reshape(B2, N2, N2)
    assert out2.shape == (B2, N2, N2)
    assert jnp.allclose(out2, ref2, atol=3e-2), "bf16 / 2-D path mismatch"

    print("KERNEL_OK")
</pallas_src>

<mosaic_0001>
module attributes {stable_mosaic.version = 11 : i64} {
  func.func @_gsl_kernel_full_k(%arg0: i32, %arg1: memref<2x128xf32, #tpu.memory_space<vmem>>, %arg2: memref<128x128xf32, #tpu.memory_space<vmem>>, %arg3: memref<1x128xf32, #tpu.memory_space<vmem>>, %arg4: memref<2x128xf32, #tpu.memory_space<vmem>>) attributes {dimension_semantics = [#tpu.dimension_semantics<parallel>], iteration_bounds = array<i64: 1>, scalar_prefetch = 0 : i64, scratch_operands = 0 : i64, tpu.core_type = #tpu.core_type<tc>, window_params = [{pipeline_mode = #tpu.pipeline_mode<synchronous>, transform_indices = @transform_0, window_bounds = array<i64: 2, 128>}, {transform_indices = @transform_1, window_bounds = array<i64: 128, 128>}, {transform_indices = @transform_2, window_bounds = array<i64: 1, 128>}, {transform_indices = @transform_3, window_bounds = array<i64: 2, 128>}]} {
    %c0 = arith.constant 0 : index
    %c0_0 = arith.constant 0 : index
    %0 = vector.load %arg1[%c0, %c0_0] : memref<2x128xf32, #tpu.memory_space<vmem>>, vector<2x128xf32>
    %c0_1 = arith.constant 0 : index
    %c0_2 = arith.constant 0 : index
    %1 = vector.load %arg2[%c0_1, %c0_2] : memref<128x128xf32, #tpu.memory_space<vmem>>, vector<128x128xf32>
    %cst = arith.constant dense<0.000000e+00> : vector<2x128xf32>
    %2 = tpu.matmul %0, %1, %cst {dimension_numbers = #tpu.dot_dimension_numbers<[1], [1], [0], [0], [0, 0, 1, 0], [], []>} : vector<2x128xf32>, vector<128x128xf32>, vector<2x128xf32> -> vector<2x128xf32>
    %c0_3 = arith.constant 0 : index
    %c0_4 = arith.constant 0 : index
    %3 = vector.load %arg3[%c0_3, %c0_4] : memref<1x128xf32, #tpu.memory_space<vmem>>, vector<1x128xf32>
    %4 = vector.broadcast %3 : vector<1x128xf32> to vector<2x128xf32>
    %5 = arith.addf %2, %4 : vector<2x128xf32>
    %6 = arith.negf %5 : vector<2x128xf32>
    %7 = math.exp %6 : vector<2x128xf32>
    %cst_5 = arith.constant 1.000000e+00 : f32
    %8 = vector.broadcast %cst_5 : f32 to vector<2x128xf32>
    %9 = arith.addf %8, %7 : vector<2x128xf32>
    %10 = arith.divf %8, %9 : vector<2x128xf32>
    %c0_6 = arith.constant 0 : index
    %c0_7 = arith.constant 0 : index
    %11 = vector.load %arg4[%c0_6, %c0_7] : memref<2x128xf32, #tpu.memory_space<vmem>>, vector<2x128xf32>
    tpu.vector_store %arg4[%c0_6, %c0_7], %10 {strides = array<i32>} : memref<2x128xf32, #tpu.memory_space<vmem>>, vector<2x128xf32>,
    return
  }
  func.func @transform_0(%arg0: i32) -> (i32, i32) {
    %c0_i32 = arith.constant 0 : i32
    %c0_i32_0 = arith.constant 0 : i32
    %c0_i32_1 = arith.constant 0 : i32
    return %c0_i32, %c0_i32_0 : i32, i32
  }
  func.func @transform_1(%arg0: i32) -> (i32, i32) {
    %c0_i32 = arith.constant 0 : i32
    %c0_i32_0 = arith.constant 0 : i32
    return %arg0, %c0_i32 : i32, i32
  }
  func.func @transform_2(%arg0: i32) -> (i32, i32) {
    %c0_i32 = arith.constant 0 : i32
    %c0_i32_0 = arith.constant 0 : i32
    return %c0_i32, %arg0 : i32, i32
  }
  func.func @transform_3(%arg0: i32) -> (i32, i32) {
    %c0_i32 = arith.constant 0 : i32
    %c0_i32_0 = arith.constant 0 : i32
    return %c0_i32, %arg0 : i32, i32
  }
}

</mosaic_0001>

<llo_original>
// kernel: tpu_custom_call.1
$region0: #{tpu_custom_call.1}
  #allocation0 [shape = 'u32[]', space=smem, size = 0x4, offset = 0x4, fixed_abs, tag = 'smem constant byte address 0x4 - core index']
  #allocation1 [shape = 'u32[144,128]{1,0:T(1,128)}', space=vmem, size = 0x12000, scoped, tag = 'internal scratch']
  %s0 = inlined_call_operand.hbm [shape: f32[2,128], index: 0, kind: input, shape index: {}]
  %s1 = inlined_call_operand.hbm [shape: f32[128,128], index: 1, kind: input, shape index: {}]
  %s2 = inlined_call_operand.vmem [shape: f32[1,128], index: 2, kind: input, shape index: {}]
  %s3 = inlined_call_operand.hbm [shape: f32[2,128], index: 3, kind: output, shape index: {}]
  %s4 = sld [smem:[#allocation0]]
  $region30: #{tpu_custom_call.1} parent=0
    _
  %s6 = ssub.s32 1, %s4
  %s7 = scalar_select 0, %s6, %s4
  $region1: #{tpu_custom_call.1} parent=0
    #allocation2 [shape = 'u8[1024]{0}', space=vmem, size = 0x400, scoped, tag = 'input window, operand 0, single buffered']
    #allocation3 [shape = 's32[1]{0}', space=sflag, size = 0x4, scoped, tag = 'scoped memory for tpu_custom_call.1']
    #allocation4 [shape = 's32[1]{0}', space=sflag, size = 0x4, scoped, tag = 'scoped memory for tpu_custom_call.1']
    #allocation5 [shape = 'u8[65536]{0}', space=vmem, size = 0x10000, scoped, tag = 'input window, operand 1, single buffered']
    #allocation6 [shape = 's32[1]{0}', space=sflag, size = 0x4, scoped, tag = 'scoped memory for tpu_custom_call.1']
    #allocation7 [shape = 'u8[1024]{0}', space=vmem, size = 0x400, scoped, tag = 'output window, operand 0, single buffered']
    %8 = vsyncpa [#allocation3], 0
    %9 = vsyncpa [#allocation6], 0
    %10 = vsyncpa [#allocation4], 0
    // Predicated region
    $region2: #{tpu_custom_call.1} parent=1 // pred_check
      _
    $region3: #{tpu_custom_call.1} parent=1 // pred_check_branch
      %12 = sbr.rel (0) target = $region5
    $region4: #{tpu_custom_call.1} parent=1 // pred_region
      %s14 = ssub.s32 32, 32
      %15 = vsyncadd [#allocation3], %s14
      %s17 = sshll.u32 [#allocation2], 4
      %s18 = int_to_ptr.vmem [resolvable:$true] %s17
      %20 = dma.hbm_to_vmem [thread:$0]  %s0, 32, %s18, [#allocation3]
    $region5: #{tpu_custom_call.1} parent=1 // pred_fallthru
      _
    // Predicated region
    $region6: #{tpu_custom_call.1} parent=1 // pred_check
      _
    $region7: #{tpu_custom_call.1} parent=1 // pred_check_branch
      %22 = sbr.rel (0) target = $region9
    $region8: #{tpu_custom_call.1} parent=1 // pred_region
      %s24 = ssub.s32 2048, 2048
      %25 = vsyncadd [#allocation6], %s24
      %s26 = sshll.u32 [#allocation5], 4
      %s27 = int_to_ptr.vmem [resolvable:$true] %s26
      %32 = dma.hbm_to_vmem [thread:$0]  %s1, 2048, %s27, [#allocation6], 128, 128, 8
    $region9: #{tpu_custom_call.1} parent=1 // pred_fallthru
      _
    // Predicated region
    $region10: #{tpu_custom_call.1} parent=1 // pred_check
      _
    $region11: #{tpu_custom_call.1} parent=1 // pred_check_branch
      %34 = sbr.rel (0) target = $region13
    $region12: #{tpu_custom_call.1} parent=1 // pred_region
      _
    $region13: #{tpu_custom_call.1} parent=1 // pred_fallthru
      _
    // Predicated region
    $region14: #{tpu_custom_call.1} parent=1 // pred_check
      _
    $region15: #{tpu_custom_call.1} parent=1 // pred_check_branch
      %36 = sbr.rel (0) target = $region17
    $region16: #{tpu_custom_call.1} parent=1 // pred_region
      %37 = dma.done [#allocation3], 32
    $region17: #{tpu_custom_call.1} parent=1 // pred_fallthru
      _
    // Predicated region
    $region18: #{tpu_custom_call.1} parent=1 // pred_check
      _
    $region19: #{tpu_custom_call.1} parent=1 // pred_check_branch
      %39 = sbr.rel (0) target = $region21
    $region20: #{tpu_custom_call.1} parent=1 // pred_region
      %40 = dma.done [#allocation6], 2048
    $region21: #{tpu_custom_call.1} parent=1 // pred_fallthru
      _
    %v41 = vld [vmem:[#allocation2] sm:$0x3]
    %v42 = vld [vmem:[#allocation5] sm:$0xff]
    %v43 = vld [vmem:[#allocation5 + $0x8] sm:$0xff]
    %v44 = vld [vmem:[#allocation5 + $0x10] sm:$0xff]
    %v45 = vld [vmem:[#allocation5 + $0x18] sm:$0xff]
    %v46 = vld [vmem:[#allocation5 + $0x20] sm:$0xff]
    %v47 = vld [vmem:[#allocation5 + $0x28] sm:$0xff]
    %v48 = vld [vmem:[#allocation5 + $0x30] sm:$0xff]
    %v49 = vld [vmem:[#allocation5 + $0x38] sm:$0xff]
    %v50 = vld [vmem:[#allocation5 + $0x40] sm:$0xff]
    %v51 = vld [vmem:[#allocation5 + $0x48] sm:$0xff]
    %v52 = vld [vmem:[#allocation5 + $0x50] sm:$0xff]
    %v53 = vld [vmem:[#allocation5 + $0x58] sm:$0xff]
    %v54 = vld [vmem:[#allocation5 + $0x60] sm:$0xff]
    %v55 = vld [vmem:[#allocation5 + $0x68] sm:$0xff]
    %v56 = vld [vmem:[#allocation5 + $0x70] sm:$0xff]
    %v57 = vld [vmem:[#allocation5 + $0x78] sm:$0xff]
    %v58 = vld [vmem:[%s2] sm:$0x1]
    %v60 = vlaneseq
    %v61 = vshrl.u32 %v60, 7
    %v62 = vsub.s32 0, %v61
    %v63 = vrot.slane %v58, %v62
    %65 = vmatprep.subr.mxu0 0.0
    %66 = vmatpush1.xpose.msra.mxu0 %v42
    %67 = vmatprep.subr.mxu0 0.0
    %68 = vmatpush1.xpose.msra.mxu0 %v43
    %69 = vmatprep.subr.mxu0 0.0
    %70 = vmatpush1.xpose.msra.mxu0 %v44
    %71 = vmatprep.subr.mxu0 0.0
    %72 = vmatpush1.xpose.msra.mxu0 %v45
    %73 = vmatprep.subr.mxu0 0.0
    %74 = vmatpush1.xpose.msra.mxu0 %v46
    %75 = vmatprep.subr.mxu0 0.0
    %76 = vmatpush1.xpose.msra.mxu0 %v47
    %77 = vmatprep.subr.mxu0 0.0
    %78 = vmatpush1.xpose.msra.mxu0 %v48
    %79 = vmatprep.subr.mxu0 0.0
    %80 = vmatpush1.xpose.msra.mxu0 %v49
    %81 = vmatprep.subr.mxu0 0.0
    %82 = vmatpush1.xpose.msra.mxu0 %v50
    %83 = vmatprep.subr.mxu0 0.0
    %84 = vmatpush1.xpose.msra.mxu0 %v51
    %85 = vmatprep.subr.mxu0 0.0
    %86 = vmatpush1.xpose.msra.mxu0 %v52
    %87 = vmatprep.subr.mxu0 0.0
    %88 = vmatpush1.xpose.msra.mxu0 %v53
    %89 = vmatprep.subr.mxu0 0.0
    %90 = vmatpush1.xpose.msra.mxu0 %v54
    %91 = vmatprep.subr.mxu0 0.0
    %92 = vmatpush1.xpose.msra.mxu0 %v55
    %93 = vmatprep.subr.mxu0 0.0
    %94 = vmatpush1.xpose.msra.mxu0 %v56
    %95 = vmatprep.subr.mxu0 0.0
    %96 = vmatpush1.xpose.msra.mxu0 %v57
    %97 = vmatprep.subr.mxu0 0.0
    %98 = vmatpush1.xpose.msra.mxu0 0.0
    %99 = vmatprep.subr.mxu0 0.0
    %100 = vmatpush1.xpose.msra.mxu0 0.0
    %101 = vmatprep.subr.mxu0 0.0
    %102 = vmatpush1.xpose.msra.mxu0 0.0
    %103 = vmatprep.subr.mxu0 0.0
    %104 = vmatpush1.xpose.msra.mxu0 0.0
    %105 = vmatprep.subr.mxu0 0.0
    %106 = vmatpush1.xpose.msra.mxu0 0.0
    %107 = vmatprep.subr.mxu0 0.0
    %108 = vmatpush1.xpose.msra.mxu0 0.0
    %109 = vmatprep.subr.mxu0 0.0
    %110 = vmatpush1.xpose.msra.mxu0 0.0
    %111 = vmatprep.subr.mxu0 0.0
    %112 = vmatpush1.xpose.msra.mxu0 0.0
    %113 = vmatprep.subr.mxu0 0.0
    %114 = vmatpush1.xpose.msra.mxu0 0.0
    %115 = vmatprep.subr.mxu0 0.0
    %116 = vmatpush1.xpose.msra.mxu0 0.0
    %117 = vmatprep.subr.mxu0 0.0
    %118 = vmatpush1.xpose.msra.mxu0 0.0
    %119 = vmatprep.subr.mxu0 0.0
    %120 = vmatpush1.xpose.msra.mxu0 0.0
    %121 = vmatprep.subr.mxu0 0.0
    %122 = vmatpush1.xpose.msra.mxu0 0.0
    %123 = vmatprep.subr.mxu0 0.0
    %124 = vmatpush1.xpose.msra.mxu0 0.0
    %125 = vmatprep.subr.mxu0 0.0
    %126 = vmatpush1.xpose.msra.mxu0 0.0
    %127 = vmatprep.subr.mxu0 0.0
    %128 = vmatpush1.xpose.msra.mxu0 0.0
    %129 = vmatprep.mubr.f32.mxu0 0.0
    %130 = vmatmul.mubr.f32.gmra.mrb[0].mxu0 %v41
    %v131 = vpop.f32.mrb[0].mxu0
    %v132 = vadd.f32 %v63, %v131
    %v133 = vpop.f32.mrb[0].mxu0
    %134 = vdwg.mxu0
    %v135 = vxor.u32 %v132, 2147483648
    %v136 = vmul.f32 %v135, 1.442695
    %v137 = vpow.pop %v136
    %v138 = vadd.f32 %v137, 1.0
    %v139 = vrcp.pop %v138
    %v140 = vmul.f32 1.0, %v139
    %141 = vst [vmem:[#allocation7] sm:$0x3] %v140
    // Predicated region
    $region22: #{tpu_custom_call.1} parent=1 // pred_check
      _
    $region23: #{tpu_custom_call.1} parent=1 // pred_check_branch
      %143 = sbr.rel (0) target = $region25
    $region24: #{tpu_custom_call.1} parent=1 // pred_region
      %s145 = ssub.s32 32, 32
      %146 = vsyncadd [#allocation4], %s145
      %s148 = sshll.u32 [#allocation7], 4
      %s149 = int_to_ptr.vmem [resolvable:$true] %s148
      %151 = dma.vmem_to_hbm [thread:$0]  %s149, 32, %s3, [#allocation4]
    $region25: #{tpu_custom_call.1} parent=1 // pred_fallthru
      _
    // Predicated region
    $region26: #{tpu_custom_call.1} parent=1 // pred_check
      _
    $region27: #{tpu_custom_call.1} parent=1 // pred_check_branch
      %153 = sbr.rel (0) target = $region29
    $region28: #{tpu_custom_call.1} parent=1 // pred_region
      %154 = dma.done [#allocation4], 32
    $region29: #{tpu_custom_call.1} parent=1 // pred_fallthru
      _
    %155 = vsyncpa [#allocation3], 1
    %156 = vsyncpa [#allocation6], 1
    %157 = vsyncpa [#allocation4], 1

</llo_original>
